<compile_context>
chip_gen: v5e
topology: v5e:2x2
jax: 0.10.0
libtpu: 0.0.40
codegen_flags: <defaults>
</compile_context>

<pallas_src>
import functools

import jax
import jax.numpy as jnp
from jax.experimental import pallas as pl
from jax.experimental.pallas import tpu as pltpu


def _lstm_kernel(x_ref, h0_ref, c0_ref, wih_ref, whh_ref, b_ref,
                 wfc_ref, bfc_ref,
                 out_ref, hN_ref, cN_ref):
    """Single-invocation kernel: input projection prologue + unrolled recurrence + head.

    x_ref   : (T*B, D)  time-major flattened input (row t*B + b)
    h0_ref  : (B, H)    initial hidden state
    c0_ref  : (B, H)    initial cell state
    wih_ref : (D, 4H)   fused input->gates weights (gate order i|f|g|o)
    whh_ref : (H, 4H)   fused hidden->gates weights
    b_ref   : (1, 4H)   combined bias (b_ih + b_hh)
    wfc_ref : (H, C)    classifier weight (transposed)
    bfc_ref : (1, C)    classifier bias
    """
    B, H = h0_ref.shape
    T = x_ref.shape[0] // B

    # ---- Prologue: fused input projection for ALL timesteps in one MXU matmul.
    #      (T*B, D) @ (D, 4H) + b  ->  (T*B, 4H)
    xp = (jnp.dot(x_ref[...], wih_ref[...], preferred_element_type=jnp.float32)
          + b_ref[...])

    w_hh = whh_ref[...]                        # (H, 4H), resident for the loop
    h = h0_ref[...].astype(jnp.float32)        # (B, H)
    c = c0_ref[...].astype(jnp.float32)        # (B, H)

    # ---- Recurrence: in-kernel, fully unrolled time loop (T is static & small).
    #      Critical path per step: one (B, H) @ (H, 4H) matmul + gate elementwise.
    for t in range(T):
        gates = xp[t * B:(t + 1) * B, :] + jnp.dot(
            h, w_hh, preferred_element_type=jnp.float32)       # (B, 4H)
        i_g = jax.nn.sigmoid(gates[:, 0 * H:1 * H])
        f_g = jax.nn.sigmoid(gates[:, 1 * H:2 * H])
        g_g = jnp.tanh(gates[:, 2 * H:3 * H])
        o_g = jax.nn.sigmoid(gates[:, 3 * H:4 * H])
        c = f_g * c + i_g * g_g
        h = o_g * jnp.tanh(c)

    # ---- Head: last hidden -> Linear -> log-softmax over classes.
    logits = (jnp.dot(h, wfc_ref[...], preferred_element_type=jnp.float32)
              + bfc_ref[...])                                   # (B, C)
    m = jnp.max(logits, axis=-1, keepdims=True)
    z = logits - m
    lse = jnp.log(jnp.sum(jnp.exp(z), axis=-1, keepdims=True))
    out_ref[...] = (z - lse).astype(out_ref.dtype)
    hN_ref[...] = h.astype(hN_ref.dtype)
    cN_ref[...] = c.astype(cN_ref.dtype)


def _full_spec(shape):
    n = len(shape)
    return pl.BlockSpec(shape, lambda i, n=n: (0,) * n)


@functools.partial(jax.jit, static_argnames=())
def char_level_lstm_forward(x, h0, c0, w_ih, w_hh, b, w_fc, b_fc):
    """
    x:     (B, T, D)   batch_first input (as in the PyTorch module)
    h0,c0: (1, B, H)   initial hidden/cell state (num_layers = 1)
    w_ih:  (D, 4H)     fused input->gates weights (gate order i|f|g|o), transposed
    w_hh:  (H, 4H)     fused hidden->gates weights, transposed
    b:     (1, 4H)     combined bias (b_ih + b_hh)
    w_fc:  (H, C)      classifier weight (transposed)
    b_fc:  (1, C)      classifier bias
    Returns (log_probs (B, C), h_n (1, B, H), c_n (1, B, H)).
    """
    B, T, D = x.shape
    H = w_hh.shape[0]
    G = w_hh.shape[1]          # 4H
    C = w_fc.shape[1]

    # Time-major, flattened to 2-D so the in-kernel projection is one matmul.
    # (Tiny op here; for long sequences produce x time-major upstream instead.)
    x2d = jnp.transpose(x, (1, 0, 2)).reshape(T * B, D)
    h0_2d = h0[0]
    c0_2d = c0[0]

    out, h_n, c_n = pl.pallas_call(
        _lstm_kernel,
        out_shape=(
            jax.ShapeDtypeStruct((B, C), jnp.float32),
            jax.ShapeDtypeStruct((B, H), jnp.float32),
            jax.ShapeDtypeStruct((B, H), jnp.float32),
        ),
        grid_spec=pltpu.PrefetchScalarGridSpec(
            num_scalar_prefetch=0,
            grid=(1,),                      # whole problem in one kernel invocation
            in_specs=[
                _full_spec((T * B, D)),     # x (time-major, flattened)
                _full_spec((B, H)),         # h0
                _full_spec((B, H)),         # c0
                _full_spec((D, G)),         # fused W_ih
                _full_spec((H, G)),         # fused W_hh
                _full_spec((1, G)),         # fused bias
                _full_spec((H, C)),         # fc weight
                _full_spec((1, C)),         # fc bias
            ],
            out_specs=[
                _full_spec((B, C)),
                _full_spec((B, H)),
                _full_spec((B, H)),
            ],
        ),
        compiler_params=pltpu.CompilerParams(
            dimension_semantics=("arbitrary",),
        ),
    )(x2d, h0_2d, c0_2d, w_ih, w_hh, b, w_fc, b_fc)

    return out, h_n[None], c_n[None]


def _reference_forward(x, h0, c0, w_ih, w_hh, b, w_fc, b_fc):
    """Pure-JAX reference matching PyTorch nn.LSTM + Linear + LogSoftmax."""
    H = w_hh.shape[0]

    def step(carry, x_t):
        h, c = carry
        gates = x_t @ w_ih + h @ w_hh + b           # (B, 4H)
        i = jax.nn.sigmoid(gates[:, 0 * H:1 * H])
        f = jax.nn.sigmoid(gates[:, 1 * H:2 * H])
        g = jnp.tanh(gates[:, 2 * H:3 * H])
        o = jax.nn.sigmoid(gates[:, 3 * H:4 * H])
        c_new = f * c + i * g
        h_new = o * jnp.tanh(c_new)
        return (h_new, c_new), h_new

    (h_n, c_n), _ = jax.lax.scan(step, (h0[0], c0[0]), jnp.transpose(x, (1, 0, 2)))
    logits = h_n @ w_fc + b_fc
    logp = jax.nn.log_softmax(logits, axis=1)
    return logp, h_n[None], c_n[None]


if __name__ == "__main__":
    # Small deterministic config (num_layers=1, as in the module default).
    B, T = 2, 8           # batch, sequence length
    D = 16                # input_size
    H = 32                # hidden_size  (4H = 128 -> one full lane width)
    C = 5                 # num_classes

    key = jax.random.PRNGKey(0)
    keys = jax.random.split(key, 10)
    bound = 1.0 / jnp.sqrt(H)   # PyTorch default LSTM/Linear init scale

    x = jax.random.normal(keys[0], (B, T, D), jnp.float32)
    h0 = jax.random.normal(keys[1], (1, B, H), jnp.float32)
    c0 = jax.random.normal(keys[2], (1, B, H), jnp.float32)

    # Fused LSTM params, gate order i|f|g|o along the 4H axis, stored transposed
    # for x @ W (i.e. torch weight_ih_l0.T reshaped to (D, 4H)).
    w_ih = jax.random.uniform(keys[3], (D, 4 * H), jnp.float32, -bound, bound)
    w_hh = jax.random.uniform(keys[4], (H, 4 * H), jnp.float32, -bound, bound)
    b_ih = jax.random.uniform(keys[5], (1, 4 * H), jnp.float32, -bound, bound)
    b_hh = jax.random.uniform(keys[6], (1, 4 * H), jnp.float32, -bound, bound)
    b = b_ih + b_hh

    # Classifier params.
    w_fc = jax.random.uniform(keys[7], (H, C), jnp.float32, -bound, bound)
    b_fc = jax.random.uniform(keys[8], (1, C), jnp.float32, -bound, bound)

    out, h_n, c_n = char_level_lstm_forward(x, h0, c0, w_ih, w_hh, b, w_fc, b_fc)
    jax.block_until_ready((out, h_n, c_n))

    ref_out, ref_h, ref_c = _reference_forward(x, h0, c0, w_ih, w_hh, b, w_fc, b_fc)
    assert jnp.allclose(out, ref_out, atol=1e-5, rtol=1e-5)
    assert jnp.allclose(h_n, ref_h, atol=1e-5, rtol=1e-5)
    assert jnp.allclose(c_n, ref_c, atol=1e-5, rtol=1e-5)

    print("KERNEL_OK")
</pallas_src>

<mosaic_0001>
module attributes {stable_mosaic.version = 11 : i64} {
  func.func @_lstm_kernel(%arg0: i32, %arg1: memref<16x16xf32, #tpu.memory_space<vmem>>, %arg2: memref<2x32xf32, #tpu.memory_space<vmem>>, %arg3: memref<2x32xf32, #tpu.memory_space<vmem>>, %arg4: memref<16x128xf32, #tpu.memory_space<vmem>>, %arg5: memref<32x128xf32, #tpu.memory_space<vmem>>, %arg6: memref<1x128xf32, #tpu.memory_space<vmem>>, %arg7: memref<32x5xf32, #tpu.memory_space<vmem>>, %arg8: memref<1x5xf32, #tpu.memory_space<vmem>>, %arg9: memref<2x5xf32, #tpu.memory_space<vmem>>, %arg10: memref<2x32xf32, #tpu.memory_space<vmem>>, %arg11: memref<2x32xf32, #tpu.memory_space<vmem>>) attributes {dimension_semantics = [#tpu.dimension_semantics<arbitrary>], iteration_bounds = array<i64: 1>, scalar_prefetch = 0 : i64, scratch_operands = 0 : i64, tpu.core_type = #tpu.core_type<tc>, window_params = [{pipeline_mode = #tpu.pipeline_mode<synchronous>, transform_indices = @transform_0, window_bounds = array<i64: 16, 16>}, {pipeline_mode = #tpu.pipeline_mode<synchronous>, transform_indices = @transform_1, window_bounds = array<i64: 2, 32>}, {pipeline_mode = #tpu.pipeline_mode<synchronous>, transform_indices = @transform_2, window_bounds = array<i64: 2, 32>}, {pipeline_mode = #tpu.pipeline_mode<synchronous>, transform_indices = @transform_3, window_bounds = array<i64: 16, 128>}, {pipeline_mode = #tpu.pipeline_mode<synchronous>, transform_indices = @transform_4, window_bounds = array<i64: 32, 128>}, {pipeline_mode = #tpu.pipeline_mode<synchronous>, transform_indices = @transform_5, window_bounds = array<i64: 1, 128>}, {pipeline_mode = #tpu.pipeline_mode<synchronous>, transform_indices = @transform_6, window_bounds = array<i64: 32, 5>}, {pipeline_mode = #tpu.pipeline_mode<synchronous>, transform_indices = @transform_7, window_bounds = array<i64: 1, 5>}, {pipeline_mode = #tpu.pipeline_mode<synchronous>, transform_indices = @transform_8, window_bounds = array<i64: 2, 5>}, {pipeline_mode = #tpu.pipeline_mode<synchronous>, transform_indices = @transform_9, window_bounds = array<i64: 2, 32>}, {pipeline_mode = #tpu.pipeline_mode<synchronous>, transform_indices = @transform_10, window_bounds = array<i64: 2, 32>}]} {
    %c0 = arith.constant 0 : index
    %c0_0 = arith.constant 0 : index
    %0 = vector.load %arg1[%c0, %c0_0] : memref<16x16xf32, #tpu.memory_space<vmem>>, vector<16x16xf32>
    %c0_1 = arith.constant 0 : index
    %c0_2 = arith.constant 0 : index
    %1 = vector.load %arg4[%c0_1, %c0_2] : memref<16x128xf32, #tpu.memory_space<vmem>>, vector<16x128xf32>
    %cst = arith.constant dense<0.000000e+00> : vector<16x128xf32>
    %2 = tpu.matmul %0, %1, %cst {dimension_numbers = #tpu.dot_dimension_numbers<[1], [0], [0], [1], [0, 0, 1, 1], [], []>} : vector<16x16xf32>, vector<16x128xf32>, vector<16x128xf32> -> vector<16x128xf32>
    %c0_3 = arith.constant 0 : index
    %c0_4 = arith.constant 0 : index
    %3 = vector.load %arg6[%c0_3, %c0_4] : memref<1x128xf32, #tpu.memory_space<vmem>>, vector<1x128xf32>
    %4 = vector.broadcast %3 : vector<1x128xf32> to vector<16x128xf32>
    %5 = arith.addf %2, %4 : vector<16x128xf32>
    %c0_5 = arith.constant 0 : index
    %c0_6 = arith.constant 0 : index
    %6 = vector.load %arg5[%c0_5, %c0_6] : memref<32x128xf32, #tpu.memory_space<vmem>>, vector<32x128xf32>
    %c0_7 = arith.constant 0 : index
    %c0_8 = arith.constant 0 : index
    %7 = vector.load %arg2[%c0_7, %c0_8] : memref<2x32xf32, #tpu.memory_space<vmem>>, vector<2x32xf32>
    %c0_9 = arith.constant 0 : index
    %c0_10 = arith.constant 0 : index
    %8 = vector.load %arg3[%c0_9, %c0_10] : memref<2x32xf32, #tpu.memory_space<vmem>>, vector<2x32xf32>
    %9 = vector.extract_strided_slice %5 {offsets = [0, 0], sizes = [2, 128], strides = [1, 1]} : vector<16x128xf32> to vector<2x128xf32>
    %cst_11 = arith.constant dense<0.000000e+00> : vector<2x128xf32>
    %10 = tpu.matmul %7, %6, %cst_11 {dimension_numbers = #tpu.dot_dimension_numbers<[1], [0], [0], [1], [0, 0, 1, 1], [], []>} : vector<2x32xf32>, vector<32x128xf32>, vector<2x128xf32> -> vector<2x128xf32>
    %11 = arith.addf %9, %10 : vector<2x128xf32>
    %12 = vector.extract_strided_slice %11 {offsets = [0, 0], sizes = [2, 32], strides = [1, 1]} : vector<2x128xf32> to vector<2x32xf32>
    %13 = arith.negf %12 : vector<2x32xf32>
    %14 = math.exp %13 : vector<2x32xf32>
    %cst_12 = arith.constant 1.000000e+00 : f32
    %15 = vector.broadcast %cst_12 : f32 to vector<2x32xf32>
    %16 = arith.addf %15, %14 : vector<2x32xf32>
    %17 = arith.divf %15, %16 : vector<2x32xf32>
    %18 = vector.extract_strided_slice %11 {offsets = [0, 32], sizes = [2, 32], strides = [1, 1]} : vector<2x128xf32> to vector<2x32xf32>
    %19 = arith.negf %18 : vector<2x32xf32>
    %20 = math.exp %19 : vector<2x32xf32>
    %cst_13 = arith.constant 1.000000e+00 : f32
    %21 = vector.broadcast %cst_13 : f32 to vector<2x32xf32>
    %22 = arith.addf %21, %20 : vector<2x32xf32>
    %23 = arith.divf %21, %22 : vector<2x32xf32>
    %24 = vector.extract_strided_slice %11 {offsets = [0, 64], sizes = [2, 32], strides = [1, 1]} : vector<2x128xf32> to vector<2x32xf32>
    %25 = math.tanh %24 : vector<2x32xf32>
    %26 = vector.extract_strided_slice %11 {offsets = [0, 96], sizes = [2, 32], strides = [1, 1]} : vector<2x128xf32> to vector<2x32xf32>
    %27 = arith.negf %26 : vector<2x32xf32>
    %28 = math.exp %27 : vector<2x32xf32>
    %cst_14 = arith.constant 1.000000e+00 : f32
    %29 = vector.broadcast %cst_14 : f32 to vector<2x32xf32>
    %30 = arith.addf %29, %28 : vector<2x32xf32>
    %31 = arith.divf %29, %30 : vector<2x32xf32>
    %32 = arith.mulf %23, %8 : vector<2x32xf32>
    %33 = arith.mulf %17, %25 : vector<2x32xf32>
    %34 = arith.addf %32, %33 : vector<2x32xf32>
    %35 = math.tanh %34 : vector<2x32xf32>
    %36 = arith.mulf %31, %35 : vector<2x32xf32>
    %37 = vector.extract_strided_slice %5 {offsets = [2, 0], sizes = [2, 128], strides = [1, 1]} : vector<16x128xf32> to vector<2x128xf32>
    %cst_15 = arith.constant dense<0.000000e+00> : vector<2x128xf32>
    %38 = tpu.matmul %36, %6, %cst_15 {dimension_numbers = #tpu.dot_dimension_numbers<[1], [0], [0], [1], [0, 0, 1, 1], [], []>} : vector<2x32xf32>, vector<32x128xf32>, vector<2x128xf32> -> vector<2x128xf32>
    %39 = arith.addf %37, %38 : vector<2x128xf32>
    %40 = vector.extract_strided_slice %39 {offsets = [0, 0], sizes = [2, 32], strides = [1, 1]} : vector<2x128xf32> to vector<2x32xf32>
    %41 = arith.negf %40 : vector<2x32xf32>
    %42 = math.exp %41 : vector<2x32xf32>
    %cst_16 = arith.constant 1.000000e+00 : f32
    %43 = vector.broadcast %cst_16 : f32 to vector<2x32xf32>
    %44 = arith.addf %43, %42 : vector<2x32xf32>
    %45 = arith.divf %43, %44 : vector<2x32xf32>
    %46 = vector.extract_strided_slice %39 {offsets = [0, 32], sizes = [2, 32], strides = [1, 1]} : vector<2x128xf32> to vector<2x32xf32>
    %47 = arith.negf %46 : vector<2x32xf32>
    %48 = math.exp %47 : vector<2x32xf32>
    %cst_17 = arith.constant 1.000000e+00 : f32
    %49 = vector.broadcast %cst_17 : f32 to vector<2x32xf32>
    %50 = arith.addf %49, %48 : vector<2x32xf32>
    %51 = arith.divf %49, %50 : vector<2x32xf32>
    %52 = vector.extract_strided_slice %39 {offsets = [0, 64], sizes = [2, 32], strides = [1, 1]} : vector<2x128xf32> to vector<2x32xf32>
    %53 = math.tanh %52 : vector<2x32xf32>
    %54 = vector.extract_strided_slice %39 {offsets = [0, 96], sizes = [2, 32], strides = [1, 1]} : vector<2x128xf32> to vector<2x32xf32>
    %55 = arith.negf %54 : vector<2x32xf32>
    %56 = math.exp %55 : vector<2x32xf32>
    %cst_18 = arith.constant 1.000000e+00 : f32
    %57 = vector.broadcast %cst_18 : f32 to vector<2x32xf32>
    %58 = arith.addf %57, %56 : vector<2x32xf32>
    %59 = arith.divf %57, %58 : vector<2x32xf32>
    %60 = arith.mulf %51, %34 : vector<2x32xf32>
    %61 = arith.mulf %45, %53 : vector<2x32xf32>
    %62 = arith.addf %60, %61 : vector<2x32xf32>
    %63 = math.tanh %62 : vector<2x32xf32>
    %64 = arith.mulf %59, %63 : vector<2x32xf32>
    %65 = vector.extract_strided_slice %5 {offsets = [4, 0], sizes = [2, 128], strides = [1, 1]} : vector<16x128xf32> to vector<2x128xf32>
    %cst_19 = arith.constant dense<0.000000e+00> : vector<2x128xf32>
    %66 = tpu.matmul %64, %6, %cst_19 {dimension_numbers = #tpu.dot_dimension_numbers<[1], [0], [0], [1], [0, 0, 1, 1], [], []>} : vector<2x32xf32>, vector<32x128xf32>, vector<2x128xf32> -> vector<2x128xf32>
    %67 = arith.addf %65, %66 : vector<2x128xf32>
    %68 = vector.extract_strided_slice %67 {offsets = [0, 0], sizes = [2, 32], strides = [1, 1]} : vector<2x128xf32> to vector<2x32xf32>
    %69 = arith.negf %68 : vector<2x32xf32>
    %70 = math.exp %69 : vector<2x32xf32>
    %cst_20 = arith.constant 1.000000e+00 : f32
    %71 = vector.broadcast %cst_20 : f32 to vector<2x32xf32>
    %72 = arith.addf %71, %70 : vector<2x32xf32>
    %73 = arith.divf %71, %72 : vector<2x32xf32>
    %74 = vector.extract_strided_slice %67 {offsets = [0, 32], sizes = [2, 32], strides = [1, 1]} : vector<2x128xf32> to vector<2x32xf32>
    %75 = arith.negf %74 : vector<2x32xf32>
    %76 = math.exp %75 : vector<2x32xf32>
    %cst_21 = arith.constant 1.000000e+00 : f32
    %77 = vector.broadcast %cst_21 : f32 to vector<2x32xf32>
    %78 = arith.addf %77, %76 : vector<2x32xf32>
    %79 = arith.divf %77, %78 : vector<2x32xf32>
    %80 = vector.extract_strided_slice %67 {offsets = [0, 64], sizes = [2, 32], strides = [1, 1]} : vector<2x128xf32> to vector<2x32xf32>
    %81 = math.tanh %80 : vector<2x32xf32>
    %82 = vector.extract_strided_slice %67 {offsets = [0, 96], sizes = [2, 32], strides = [1, 1]} : vector<2x128xf32> to vector<2x32xf32>
    %83 = arith.negf %82 : vector<2x32xf32>
    %84 = math.exp %83 : vector<2x32xf32>
    %cst_22 = arith.constant 1.000000e+00 : f32
    %85 = vector.broadcast %cst_22 : f32 to vector<2x32xf32>
    %86 = arith.addf %85, %84 : vector<2x32xf32>
    %87 = arith.divf %85, %86 : vector<2x32xf32>
    %88 = arith.mulf %79, %62 : vector<2x32xf32>
    %89 = arith.mulf %73, %81 : vector<2x32xf32>
    %90 = arith.addf %88, %89 : vector<2x32xf32>
    %91 = math.tanh %90 : vector<2x32xf32>
    %92 = arith.mulf %87, %91 : vector<2x32xf32>
    %93 = vector.extract_strided_slice %5 {offsets = [6, 0], sizes = [2, 128], strides = [1, 1]} : vector<16x128xf32> to vector<2x128xf32>
    %cst_23 = arith.constant dense<0.000000e+00> : vector<2x128xf32>
    %94 = tpu.matmul %92, %6, %cst_23 {dimension_numbers = #tpu.dot_dimension_numbers<[1], [0], [0], [1], [0, 0, 1, 1], [], []>} : vector<2x32xf32>, vector<32x128xf32>, vector<2x128xf32> -> vector<2x128xf32>
    %95 = arith.addf %93, %94 : vector<2x128xf32>
    %96 = vector.extract_strided_slice %95 {offsets = [0, 0], sizes = [2, 32], strides = [1, 1]} : vector<2x128xf32> to vector<2x32xf32>
    %97 = arith.negf %96 : vector<2x32xf32>
    %98 = math.exp %97 : vector<2x32xf32>
    %cst_24 = arith.constant 1.000000e+00 : f32
    %99 = vector.broadcast %cst_24 : f32 to vector<2x32xf32>
    %100 = arith.addf %99, %98 : vector<2x32xf32>
    %101 = arith.divf %99, %100 : vector<2x32xf32>
    %102 = vector.extract_strided_slice %95 {offsets = [0, 32], sizes = [2, 32], strides = [1, 1]} : vector<2x128xf32> to vector<2x32xf32>
    %103 = arith.negf %102 : vector<2x32xf32>
    %104 = math.exp %103 : vector<2x32xf32>
    %cst_25 = arith.constant 1.000000e+00 : f32
    %105 = vector.broadcast %cst_25 : f32 to vector<2x32xf32>
    %106 = arith.addf %105, %104 : vector<2x32xf32>
    %107 = arith.divf %105, %106 : vector<2x32xf32>
    %108 = vector.extract_strided_slice %95 {offsets = [0, 64], sizes = [2, 32], strides = [1, 1]} : vector<2x128xf32> to vector<2x32xf32>
    %109 = math.tanh %108 : vector<2x32xf32>
    %110 = vector.extract_strided_slice %95 {offsets = [0, 96], sizes = [2, 32], strides = [1, 1]} : vector<2x128xf32> to vector<2x32xf32>
    %111 = arith.negf %110 : vector<2x32xf32>
    %112 = math.exp %111 : vector<2x32xf32>
    %cst_26 = arith.constant 1.000000e+00 : f32
    %113 = vector.broadcast %cst_26 : f32 to vector<2x32xf32>
    %114 = arith.addf %113, %112 : vector<2x32xf32>
    %115 = arith.divf %113, %114 : vector<2x32xf32>
    %116 = arith.mulf %107, %90 : vector<2x32xf32>
    %117 = arith.mulf %101, %109 : vector<2x32xf32>
    %118 = arith.addf %116, %117 : vector<2x32xf32>
    %119 = math.tanh %118 : vector<2x32xf32>
    %120 = arith.mulf %115, %119 : vector<2x32xf32>
    %121 = vector.extract_strided_slice %5 {offsets = [8, 0], sizes = [2, 128], strides = [1, 1]} : vector<16x128xf32> to vector<2x128xf32>
    %cst_27 = arith.constant dense<0.000000e+00> : vector<2x128xf32>
    %122 = tpu.matmul %120, %6, %cst_27 {dimension_numbers = #tpu.dot_dimension_numbers<[1], [0], [0], [1], [0, 0, 1, 1], [], []>} : vector<2x32xf32>, vector<32x128xf32>, vector<2x128xf32> -> vector<2x128xf32>
    %123 = arith.addf %121, %122 : vector<2x128xf32>
    %124 = vector.extract_strided_slice %123 {offsets = [0, 0], sizes = [2, 32], strides = [1, 1]} : vector<2x128xf32> to vector<2x32xf32>
    %125 = arith.negf %124 : vector<2x32xf32>
    %126 = math.exp %125 : vector<2x32xf32>
    %cst_28 = arith.constant 1.000000e+00 : f32
    %127 = vector.broadcast %cst_28 : f32 to vector<2x32xf32>
    %128 = arith.addf %127, %126 : vector<2x32xf32>
    %129 = arith.divf %127, %128 : vector<2x32xf32>
    %130 = vector.extract_strided_slice %123 {offsets = [0, 32], sizes = [2, 32], strides = [1, 1]} : vector<2x128xf32> to vector<2x32xf32>
    %131 = arith.negf %130 : vector<2x32xf32>
    %132 = math.exp %131 : vector<2x32xf32>
    %cst_29 = arith.constant 1.000000e+00 : f32
    %133 = vector.broadcast %cst_29 : f32 to vector<2x32xf32>
    %134 = arith.addf %133, %132 : vector<2x32xf32>
    %135 = arith.divf %133, %134 : vector<2x32xf32>
    %136 = vector.extract_strided_slice %123 {offsets = [0, 64], sizes = [2, 32], strides = [1, 1]} : vector<2x128xf32> to vector<2x32xf32>
    %137 = math.tanh %136 : vector<2x32xf32>
    %138 = vector.extract_strided_slice %123 {offsets = [0, 96], sizes = [2, 32], strides = [1, 1]} : vector<2x128xf32> to vector<2x32xf32>
    %139 = arith.negf %138 : vector<2x32xf32>
    %140 = math.exp %139 : vector<2x32xf32>
    %cst_30 = arith.constant 1.000000e+00 : f32
    %141 = vector.broadcast %cst_30 : f32 to vector<2x32xf32>
    %142 = arith.addf %141, %140 : vector<2x32xf32>
    %143 = arith.divf %141, %142 : vector<2x32xf32>
    %144 = arith.mulf %135, %118 : vector<2x32xf32>
    %145 = arith.mulf %129, %137 : vector<2x32xf32>
    %146 = arith.addf %144, %145 : vector<2x32xf32>
    %147 = math.tanh %146 : vector<2x32xf32>
    %148 = arith.mulf %143, %147 : vector<2x32xf32>
    %149 = vector.extract_strided_slice %5 {offsets = [10, 0], sizes = [2, 128], strides = [1, 1]} : vector<16x128xf32> to vector<2x128xf32>
    %cst_31 = arith.constant dense<0.000000e+00> : vector<2x128xf32>
    %150 = tpu.matmul %148, %6, %cst_31 {dimension_numbers = #tpu.dot_dimension_numbers<[1], [0], [0], [1], [0, 0, 1, 1], [], []>} : vector<2x32xf32>, vector<32x128xf32>, vector<2x128xf32> -> vector<2x128xf32>
    %151 = arith.addf %149, %150 : vector<2x128xf32>
    %152 = vector.extract_strided_slice %151 {offsets = [0, 0], sizes = [2, 32], strides = [1, 1]} : vector<2x128xf32> to vector<2x32xf32>
    %153 = arith.negf %152 : vector<2x32xf32>
    %154 = math.exp %153 : vector<2x32xf32>
    %cst_32 = arith.constant 1.000000e+00 : f32
    %155 = vector.broadcast %cst_32 : f32 to vector<2x32xf32>
    %156 = arith.addf %155, %154 : vector<2x32xf32>
    %157 = arith.divf %155, %156 : vector<2x32xf32>
    %158 = vector.extract_strided_slice %151 {offsets = [0, 32], sizes = [2, 32], strides = [1, 1]} : vector<2x128xf32> to vector<2x32xf32>
    %159 = arith.negf %158 : vector<2x32xf32>
    %160 = math.exp %159 : vector<2x32xf32>
    %cst_33 = arith.constant 1.000000e+00 : f32
    %161 = vector.broadcast %cst_33 : f32 to vector<2x32xf32>
    %162 = arith.addf %161, %160 : vector<2x32xf32>
    %163 = arith.divf %161, %162 : vector<2x32xf32>
    %164 = vector.extract_strided_slice %151 {offsets = [0, 64], sizes = [2, 32], strides = [1, 1]} : vector<2x128xf32> to vector<2x32xf32>
    %165 = math.tanh %164 : vector<2x32xf32>
    %166 = vector.extract_strided_slice %151 {offsets = [0, 96], sizes = [2, 32], strides = [1, 1]} : vector<2x128xf32> to vector<2x32xf32>
    %167 = arith.negf %166 : vector<2x32xf32>
    %168 = math.exp %167 : vector<2x32xf32>
    %cst_34 = arith.constant 1.000000e+00 : f32
    %169 = vector.broadcast %cst_34 : f32 to vector<2x32xf32>
    %170 = arith.addf %169, %168 : vector<2x32xf32>
    %171 = arith.divf %169, %170 : vector<2x32xf32>
    %172 = arith.mulf %163, %146 : vector<2x32xf32>
    %173 = arith.mulf %157, %165 : vector<2x32xf32>
    %174 = arith.addf %172, %173 : vector<2x32xf32>
    %175 = math.tanh %174 : vector<2x32xf32>
    %176 = arith.mulf %171, %175 : vector<2x32xf32>
    %177 = vector.extract_strided_slice %5 {offsets = [12, 0], sizes = [2, 128], strides = [1, 1]} : vector<16x128xf32> to vector<2x128xf32>
    %cst_35 = arith.constant dense<0.000000e+00> : vector<2x128xf32>
    %178 = tpu.matmul %176, %6, %cst_35 {dimension_numbers = #tpu.dot_dimension_numbers<[1], [0], [0], [1], [0, 0, 1, 1], [], []>} : vector<2x32xf32>, vector<32x128xf32>, vector<2x128xf32> -> vector<2x128xf32>
    %179 = arith.addf %177, %178 : vector<2x128xf32>
    %180 = vector.extract_strided_slice %179 {offsets = [0, 0], sizes = [2, 32], strides = [1, 1]} : vector<2x128xf32> to vector<2x32xf32>
    %181 = arith.negf %180 : vector<2x32xf32>
    %182 = math.exp %181 : vector<2x32xf32>
    %cst_36 = arith.constant 1.000000e+00 : f32
    %183 = vector.broadcast %cst_36 : f32 to vector<2x32xf32>
    %184 = arith.addf %183, %182 : vector<2x32xf32>
    %185 = arith.divf %183, %184 : vector<2x32xf32>
    %186 = vector.extract_strided_slice %179 {offsets = [0, 32], sizes = [2, 32], strides = [1, 1]} : vector<2x128xf32> to vector<2x32xf32>
    %187 = arith.negf %186 : vector<2x32xf32>
    %188 = math.exp %187 : vector<2x32xf32>
    %cst_37 = arith.constant 1.000000e+00 : f32
    %189 = vector.broadcast %cst_37 : f32 to vector<2x32xf32>
    %190 = arith.addf %189, %188 : vector<2x32xf32>
    %191 = arith.divf %189, %190 : vector<2x32xf32>
    %192 = vector.extract_strided_slice %179 {offsets = [0, 64], sizes = [2, 32], strides = [1, 1]} : vector<2x128xf32> to vector<2x32xf32>
    %193 = math.tanh %192 : vector<2x32xf32>
    %194 = vector.extract_strided_slice %179 {offsets = [0, 96], sizes = [2, 32], strides = [1, 1]} : vector<2x128xf32> to vector<2x32xf32>
    %195 = arith.negf %194 : vector<2x32xf32>
    %196 = math.exp %195 : vector<2x32xf32>
    %cst_38 = arith.constant 1.000000e+00 : f32
    %197 = vector.broadcast %cst_38 : f32 to vector<2x32xf32>
    %198 = arith.addf %197, %196 : vector<2x32xf32>
    %199 = arith.divf %197, %198 : vector<2x32xf32>
    %200 = arith.mulf %191, %174 : vector<2x32xf32>
    %201 = arith.mulf %185, %193 : vector<2x32xf32>
    %202 = arith.addf %200, %201 : vector<2x32xf32>
    %203 = math.tanh %202 : vector<2x32xf32>
    %204 = arith.mulf %199, %203 : vector<2x32xf32>
    %205 = vector.extract_strided_slice %5 {offsets = [14, 0], sizes = [2, 128], strides = [1, 1]} : vector<16x128xf32> to vector<2x128xf32>
    %cst_39 = arith.constant dense<0.000000e+00> : vector<2x128xf32>
    %206 = tpu.matmul %204, %6, %cst_39 {dimension_numbers = #tpu.dot_dimension_numbers<[1], [0], [0], [1], [0, 0, 1, 1], [], []>} : vector<2x32xf32>, vector<32x128xf32>, vector<2x128xf32> -> vector<2x128xf32>
    %207 = arith.addf %205, %206 : vector<2x128xf32>
    %208 = vector.extract_strided_slice %207 {offsets = [0, 0], sizes = [2, 32], strides = [1, 1]} : vector<2x128xf32> to vector<2x32xf32>
    %209 = arith.negf %208 : vector<2x32xf32>
    %210 = math.exp %209 : vector<2x32xf32>
    %cst_40 = arith.constant 1.000000e+00 : f32
    %211 = vector.broadcast %cst_40 : f32 to vector<2x32xf32>
    %212 = arith.addf %211, %210 : vector<2x32xf32>
    %213 = arith.divf %211, %212 : vector<2x32xf32>
    %214 = vector.extract_strided_slice %207 {offsets = [0, 32], sizes = [2, 32], strides = [1, 1]} : vector<2x128xf32> to vector<2x32xf32>
    %215 = arith.negf %214 : vector<2x32xf32>
    %216 = math.exp %215 : vector<2x32xf32>
    %cst_41 = arith.constant 1.000000e+00 : f32
    %217 = vector.broadcast %cst_41 : f32 to vector<2x32xf32>
    %218 = arith.addf %217, %216 : vector<2x32xf32>
    %219 = arith.divf %217, %218 : vector<2x32xf32>
    %220 = vector.extract_strided_slice %207 {offsets = [0, 64], sizes = [2, 32], strides = [1, 1]} : vector<2x128xf32> to vector<2x32xf32>
    %221 = math.tanh %220 : vector<2x32xf32>
    %222 = vector.extract_strided_slice %207 {offsets = [0, 96], sizes = [2, 32], strides = [1, 1]} : vector<2x128xf32> to vector<2x32xf32>
    %223 = arith.negf %222 : vector<2x32xf32>
    %224 = math.exp %223 : vector<2x32xf32>
    %cst_42 = arith.constant 1.000000e+00 : f32
    %225 = vector.broadcast %cst_42 : f32 to vector<2x32xf32>
    %226 = arith.addf %225, %224 : vector<2x32xf32>
    %227 = arith.divf %225, %226 : vector<2x32xf32>
    %228 = arith.mulf %219, %202 : vector<2x32xf32>
    %229 = arith.mulf %213, %221 : vector<2x32xf32>
    %230 = arith.addf %228, %229 : vector<2x32xf32>
    %231 = math.tanh %230 : vector<2x32xf32>
    %232 = arith.mulf %227, %231 : vector<2x32xf32>
    %c0_43 = arith.constant 0 : index
    %c0_44 = arith.constant 0 : index
    %233 = vector.load %arg7[%c0_43, %c0_44] : memref<32x5xf32, #tpu.memory_space<vmem>>, vector<32x5xf32>
    %cst_45 = arith.constant dense<0.000000e+00> : vector<2x5xf32>
    %234 = tpu.matmul %232, %233, %cst_45 {dimension_numbers = #tpu.dot_dimension_numbers<[1], [0], [0], [1], [0, 0, 1, 1], [], []>} : vector<2x32xf32>, vector<32x5xf32>, vector<2x5xf32> -> vector<2x5xf32>
    %c0_46 = arith.constant 0 : index
    %c0_47 = arith.constant 0 : index
    %235 = vector.load %arg8[%c0_46, %c0_47] : memref<1x5xf32, #tpu.memory_space<vmem>>, vector<1x5xf32>
    %236 = vector.broadcast %235 : vector<1x5xf32> to vector<2x5xf32>
    %237 = arith.addf %234, %236 : vector<2x5xf32>
    %cst_48 = arith.constant dense<0xFF800000> : vector<2xf32>
    %238 = vector.multi_reduction <maximumf>, %237, %cst_48 [1] : vector<2x5xf32> to vector<2xf32>
    %239 = vector.shape_cast %238 : vector<2xf32> to vector<2x1xf32>
    %240 = vector.broadcast %239 : vector<2x1xf32> to vector<2x5xf32>
    %241 = arith.subf %237, %240 : vector<2x5xf32>
    %242 = math.exp %241 : vector<2x5xf32>
    %cst_49 = arith.constant dense<0.000000e+00> : vector<2xf32>
    %243 = vector.multi_reduction <add>, %242, %cst_49 [1] : vector<2x5xf32> to vector<2xf32>
    %244 = vector.shape_cast %243 : vector<2xf32> to vector<2x1xf32>
    %245 = math.log %244 : vector<2x1xf32>
    %246 = vector.broadcast %245 : vector<2x1xf32> to vector<2x5xf32>
    %247 = arith.subf %241, %246 : vector<2x5xf32>
    %c0_50 = arith.constant 0 : index
    %c0_51 = arith.constant 0 : index
    %248 = vector.load %arg9[%c0_50, %c0_51] : memref<2x5xf32, #tpu.memory_space<vmem>>, vector<2x5xf32>
    tpu.vector_store %arg9[%c0_50, %c0_51], %247 {strides = array<i32>} : memref<2x5xf32, #tpu.memory_space<vmem>>, vector<2x5xf32>,
    %c0_52 = arith.constant 0 : index
    %c0_53 = arith.constant 0 : index
    %249 = vector.load %arg10[%c0_52, %c0_53] : memref<2x32xf32, #tpu.memory_space<vmem>>, vector<2x32xf32>
    tpu.vector_store %arg10[%c0_52, %c0_53], %232 {strides = array<i32>} : memref<2x32xf32, #tpu.memory_space<vmem>>, vector<2x32xf32>,
    %c0_54 = arith.constant 0 : index
    %c0_55 = arith.constant 0 : index
    %250 = vector.load %arg11[%c0_54, %c0_55] : memref<2x32xf32, #tpu.memory_space<vmem>>, vector<2x32xf32>
    tpu.vector_store %arg11[%c0_54, %c0_55], %230 {strides = array<i32>} : memref<2x32xf32, #tpu.memory_space<vmem>>, vector<2x32xf32>,
    return
  }
  func.func @transform_0(%arg0: i32) -> (i32, i32) {
    %c0_i32 = arith.constant 0 : i32
    %c0_i32_0 = arith.constant 0 : i32
    %c0_i32_1 = arith.constant 0 : i32
    return %c0_i32, %c0_i32_0 : i32, i32
  }
  func.func @transform_1(%arg0: i32) -> (i32, i32) {
    %c0_i32 = arith.constant 0 : i32
    %c0_i32_0 = arith.constant 0 : i32
    %c0_i32_1 = arith.constant 0 : i32
    return %c0_i32, %c0_i32_0 : i32, i32
  }
  func.func @transform_2(%arg0: i32) -> (i32, i32) {
    %c0_i32 = arith.constant 0 : i32
    %c0_i32_0 = arith.constant 0 : i32
    %c0_i32_1 = arith.constant 0 : i32
    return %c0_i32, %c0_i32_0 : i32, i32
  }
  func.func @transform_3(%arg0: i32) -> (i32, i32) {
    %c0_i32 = arith.constant 0 : i32
    %c0_i32_0 = arith.constant 0 : i32
    %c0_i32_1 = arith.constant 0 : i32
    return %c0_i32, %c0_i32_0 : i32, i32
  }
  func.func @transform_4(%arg0: i32) -> (i32, i32) {
    %c0_i32 = arith.constant 0 : i32
    %c0_i32_0 = arith.constant 0 : i32
    %c0_i32_1 = arith.constant 0 : i32
    return %c0_i32, %c0_i32_0 : i32, i32
  }
  func.func @transform_5(%arg0: i32) -> (i32, i32) {
    %c0_i32 = arith.constant 0 : i32
    %c0_i32_0 = arith.constant 0 : i32
    %c0_i32_1 = arith.constant 0 : i32
    return %c0_i32, %c0_i32_0 : i32, i32
  }
  func.func @transform_6(%arg0: i32) -> (i32, i32) {
    %c0_i32 = arith.constant 0 : i32
    %c0_i32_0 = arith.constant 0 : i32
    %c0_i32_1 = arith.constant 0 : i32
    return %c0_i32, %c0_i32_0 : i32, i32
  }
  func.func @transform_7(%arg0: i32) -> (i32, i32) {
    %c0_i32 = arith.constant 0 : i32
    %c0_i32_0 = arith.constant 0 : i32
    %c0_i32_1 = arith.constant 0 : i32
    return %c0_i32, %c0_i32_0 : i32, i32
  }
  func.func @transform_8(%arg0: i32) -> (i32, i32) {
    %c0_i32 = arith.constant 0 : i32
    %c0_i32_0 = arith.constant 0 : i32
    %c0_i32_1 = arith.constant 0 : i32
    return %c0_i32, %c0_i32_0 : i32, i32
  }
  func.func @transform_9(%arg0: i32) -> (i32, i32) {
    %c0_i32 = arith.constant 0 : i32
    %c0_i32_0 = arith.constant 0 : i32
    %c0_i32_1 = arith.constant 0 : i32
    return %c0_i32, %c0_i32_0 : i32, i32
  }
  func.func @transform_10(%arg0: i32) -> (i32, i32) {
    %c0_i32 = arith.constant 0 : i32
    %c0_i32_0 = arith.constant 0 : i32
    %c0_i32_1 = arith.constant 0 : i32
    return %c0_i32, %c0_i32_0 : i32, i32
  }
}

</mosaic_0001>

<llo_original>
// kernel: char_level_lstm_forward.1
$region0: #{char_level_lstm_forward.1}
  #allocation0 [shape = 'u32[]', space=smem, size = 0x4, offset = 0x4, fixed_abs, tag = 'smem constant byte address 0x4 - core index']
  #allocation1 [shape = 'u32[72,128]{1,0:T(1,128)}', space=vmem, size = 0x9000, scoped, tag = 'internal scratch']
  %s0 = inlined_call_operand.vmem [shape: f32[16,16], index: 0, kind: input, shape index: {}]
  %s1 = inlined_call_operand.vmem [shape: f32[2,32], index: 1, kind: input, shape index: {}]
  %s2 = inlined_call_operand.vmem [shape: f32[2,32], index: 2, kind: input, shape index: {}]
  %s3 = inlined_call_operand.vmem [shape: f32[16,128], index: 3, kind: input, shape index: {}]
  %s4 = inlined_call_operand.vmem [shape: f32[32,128], index: 4, kind: input, shape index: {}]
  %s5 = inlined_call_operand.vmem [shape: f32[1,128], index: 5, kind: input, shape index: {}]
  %s6 = inlined_call_operand.vmem [shape: f32[32,5], index: 6, kind: input, shape index: {}]
  %s7 = inlined_call_operand.vmem [shape: f32[1,5], index: 7, kind: input, shape index: {}]
  %s8 = inlined_call_operand.hbm [shape: f32[2,5], index: 8, kind: output, shape index: {0}]
  %s9 = inlined_call_operand.hbm [shape: f32[2,32], index: 9, kind: output, shape index: {1}]
  %s10 = inlined_call_operand.hbm [shape: f32[2,32], index: 10, kind: output, shape index: {2}]
  %11 = xla_tuple %s8, %s9, %s10
  %s12 = sld [smem:[#allocation0]]
  $region58: #{char_level_lstm_forward.1} parent=0
    _
  %s14 = ssub.s32 1, %s12
  %s15 = scalar_select 0, %s14, %s12
  $region1: #{char_level_lstm_forward.1} parent=0
    #allocation2 [shape = 'u8[1024]{0}', space=vmem, size = 0x400, scoped, tag = 'output window, operand 0, single buffered']
    #allocation3 [shape = 's32[1]{0}', space=sflag, size = 0x4, scoped, tag = 'scoped memory for char_level_lstm_forward.1']
    #allocation4 [shape = 'u8[1024]{0}', space=vmem, size = 0x400, scoped, tag = 'output window, operand 1, single buffered']
    #allocation5 [shape = 's32[1]{0}', space=sflag, size = 0x4, scoped, tag = 'scoped memory for char_level_lstm_forward.1']
    #allocation6 [shape = 'u8[1024]{0}', space=vmem, size = 0x400, scoped, tag = 'output window, operand 2, single buffered']
    %16 = vsyncpa [#allocation3], 0
    %17 = vsyncpa [#allocation5], 0
    // Predicated region
    $region2: #{char_level_lstm_forward.1} parent=1 // pred_check
      _
    $region3: #{char_level_lstm_forward.1} parent=1 // pred_check_branch
      %19 = sbr.rel (0) target = $region5
    $region4: #{char_level_lstm_forward.1} parent=1 // pred_region
      _
    $region5: #{char_level_lstm_forward.1} parent=1 // pred_fallthru
      _
    // Predicated region
    $region6: #{char_level_lstm_forward.1} parent=1 // pred_check
      _
    $region7: #{char_level_lstm_forward.1} parent=1 // pred_check_branch
      %21 = sbr.rel (0) target = $region9
    $region8: #{char_level_lstm_forward.1} parent=1 // pred_region
      _
    $region9: #{char_level_lstm_forward.1} parent=1 // pred_fallthru
      _
    // Predicated region
    $region10: #{char_level_lstm_forward.1} parent=1 // pred_check
      _
    $region11: #{char_level_lstm_forward.1} parent=1 // pred_check_branch
      %23 = sbr.rel (0) target = $region13
    $region12: #{char_level_lstm_forward.1} parent=1 // pred_region
      _
    $region13: #{char_level_lstm_forward.1} parent=1 // pred_fallthru
      _
    // Predicated region
    $region14: #{char_level_lstm_forward.1} parent=1 // pred_check
      _
    $region15: #{char_level_lstm_forward.1} parent=1 // pred_check_branch
      %25 = sbr.rel (0) target = $region17
    $region16: #{char_level_lstm_forward.1} parent=1 // pred_region
      _
    $region17: #{char_level_lstm_forward.1} parent=1 // pred_fallthru
      _
    // Predicated region
    $region18: #{char_level_lstm_forward.1} parent=1 // pred_check
      _
    $region19: #{char_level_lstm_forward.1} parent=1 // pred_check_branch
      %27 = sbr.rel (0) target = $region21
    $region20: #{char_level_lstm_forward.1} parent=1 // pred_region
      _
    $region21: #{char_level_lstm_forward.1} parent=1 // pred_fallthru
      _
    // Predicated region
    $region22: #{char_level_lstm_forward.1} parent=1 // pred_check
      _
    $region23: #{char_level_lstm_forward.1} parent=1 // pred_check_branch
      %29 = sbr.rel (0) target = $region25
    $region24: #{char_level_lstm_forward.1} parent=1 // pred_region
      _
    $region25: #{char_level_lstm_forward.1} parent=1 // pred_fallthru
      _
    // Predicated region
    $region26: #{char_level_lstm_forward.1} parent=1 // pred_check
      _
    $region27: #{char_level_lstm_forward.1} parent=1 // pred_check_branch
      %31 = sbr.rel (0) target = $region29
    $region28: #{char_level_lstm_forward.1} parent=1 // pred_region
      _
    $region29: #{char_level_lstm_forward.1} parent=1 // pred_fallthru
      _
    // Predicated region
    $region30: #{char_level_lstm_forward.1} parent=1 // pred_check
      _
    $region31: #{char_level_lstm_forward.1} parent=1 // pred_check_branch
      %33 = sbr.rel (0) target = $region33
    $region32: #{char_level_lstm_forward.1} parent=1 // pred_region
      _
    $region33: #{char_level_lstm_forward.1} parent=1 // pred_fallthru
      _
    %v34 = vld [vmem:[%s0] sm:$0xff]
    %v35 = vld [vmem:[%s0 + $0x8] sm:$0xff]
    %v36 = vld [vmem:[%s3] sm:$0xff]
    %v37 = vld [vmem:[%s3 + $0x8] sm:$0xff]
    %v38 = vld [vmem:[%s5] sm:$0x1]
    %v40 = vperm.slane %v38, 0
    %vm42 = vcmask 130048
    %v44 = vsel %vm42, %v34, 0
    %v47 = vsel %vm42, %v35, 0
    %49 = vmatpush.msra.mxu0 0.0
    %50 = vmatpush.msra.mxu0 0.0
    %51 = vmatpush.msra.mxu0 0.0
    %52 = vmatpush.msra.mxu0 0.0
    %53 = vmatpush.msra.mxu0 0.0
    %54 = vmatpush.msra.mxu0 0.0
    %55 = vmatpush.msra.mxu0 0.0
    %56 = vmatpush.msra.mxu0 0.0
    %57 = vmatpush.msra.mxu0 0.0
    %58 = vmatpush.msra.mxu0 0.0
    %59 = vmatpush.msra.mxu0 0.0
    %60 = vmatpush.msra.mxu0 0.0
    %61 = vmatpush.msra.mxu0 0.0
    %62 = vmatpush.msra.mxu0 0.0
    %63 = vmatpush.msra.mxu0 %v37
    %64 = vmatpush.msra.mxu0 %v36
    %65 = vmatmul.f32.gmra.mxu0 %v44
    %v66 = vpop.f32.mrf.mxu0
    %v67 = vadd.f32 %v40, %v66
    %68 = vmatmul.f32.gmra.mxu0 %v47
    %v69 = vpop.f32.mrf.mxu0
    %v70 = vadd.f32 %v40, %v69
    %71 = vdwg.mxu0
    %v72 = vld [vmem:[%s4] sm:$0xff]
    %v73 = vld [vmem:[%s4 + $0x8] sm:$0xff]
    %v74 = vld [vmem:[%s4 + $0x10] sm:$0xff]
    %v75 = vld [vmem:[%s4 + $0x18] sm:$0xff]
    %v76 = vld [vmem:[%s1] sm:$0x3]
    %v77 = vld [vmem:[%s2] sm:$0x3]
    %vm78 = vcmask 261120
    %v80 = vsel %vm78, %v76, 0
    %82 = vmatpush.msra.mxu0 0.0
    %83 = vmatpush.msra.mxu0 0.0
    %84 = vmatpush.msra.mxu0 0.0
    %85 = vmatpush.msra.mxu0 0.0
    %86 = vmatpush.msra.mxu0 0.0
    %87 = vmatpush.msra.mxu0 0.0
    %88 = vmatpush.msra.mxu0 0.0
    %89 = vmatpush.msra.mxu0 0.0
    %90 = vmatpush.msra.mxu0 0.0
    %91 = vmatpush.msra.mxu0 0.0
    %92 = vmatpush.msra.mxu0 0.0
    %93 = vmatpush.msra.mxu0 0.0
    %94 = vmatpush.msra.mxu0 %v75
    %95 = vmatpush.msra.mxu0 %v74
    %96 = vmatpush.msra.mxu0 %v73
    %97 = vmatpush.msra.mxu0 %v72
    %98 = vmatmul.f32.gmra.mxu0 %v80
    %v99 = vpop.f32.mrf.mxu0
    %v100 = vadd.f32 0.0, %v99
    %101 = vdwg.mxu0
    %v102 = vadd.f32 %v67, %v100
    %v103 = vxor.u32 %v102, 2147483648
    %v104 = vmul.f32 %v103, 1.442695
    %v105 = vpow.pop %v104
    %v106 = vadd.f32 %v105, 1.0
    %v107 = vrcp.pop %v106
    %v108 = vmul.f32 %v106, %v107
    %v109 = vsub.f32 1.0, %v108
    %v110 = vmul.f32 %v107, %v109
    %v111 = vadd.f32 %v107, %v110
    %vm112 = vweird.f32 %v106
    %vm113 = vweird.f32 %v107
    %vm114 = vmor %vm112, %vm113
    %v115 = vsel %vm114, %v107, %v111
    %v116 = vand.u32 2147483647, %v106
    %vm117 = vcmp.eq.f32.partialorder %v116, 8.507059e+37
    %v118 = vand.u32 %v106, 2147483648
    %v119 = vor.u32 1.1754944e-38, %v118
    %v120 = vsel %vm117, %v119, %v115
    %v121 = vmul.f32 1.0, %v120
    %v122 = vtanh.pop %v102
    %124 = vrot.lane.b32.xlu0 %v77, 32
    %v125 = vpop.permute.xlu0 %124
    %v127 = vmul.f32 %v121, %v125
    %129 = vrot.lane.b32.xlu0 %v122, 64
    %v130 = vpop.permute.xlu0 %129
    %v132 = vmul.f32 %v121, %v130
    %134 = vrot.lane.b32.xlu0 %v132, 32
    %v135 = vpop.permute.xlu0 %134
    %v137 = vadd.f32 %v127, %v135
    %v138 = vtanh.pop %v137
    %140 = vrot.lane.b32.xlu0 %v138, 64
    %v141 = vpop.permute.xlu0 %140
    %v143 = vmul.f32 %v121, %v141
    %145 = vrot.lane.b32.xlu0 %v143, 32
    %v146 = vpop.permute.xlu0 %145
    %v147 = vsel %vm78, %v146, 0
    %149 = vmatpush.msra.mxu0 0.0
    %150 = vmatpush.msra.mxu0 0.0
    %151 = vmatpush.msra.mxu0 0.0
    %152 = vmatpush.msra.mxu0 0.0
    %153 = vmatpush.msra.mxu0 0.0
    %154 = vmatpush.msra.mxu0 0.0
    %155 = vmatpush.msra.mxu0 0.0
    %156 = vmatpush.msra.mxu0 0.0
    %157 = vmatpush.msra.mxu0 0.0
    %158 = vmatpush.msra.mxu0 0.0
    %159 = vmatpush.msra.mxu0 0.0
    %160 = vmatpush.msra.mxu0 0.0
    %161 = vmatpush.msra.mxu0 %v75
    %162 = vmatpush.msra.mxu0 %v74
    %163 = vmatpush.msra.mxu0 %v73
    %164 = vmatpush.msra.mxu0 %v72
    %165 = vmatmul.f32.gmra.mxu0 %v147
    %v166 = vpop.f32.mrf.mxu0
    %v167 = vadd.f32 0.0, %v166
    %168 = vdwg.mxu0
    %v170 = vrot.slane %v167, 6
    %v172 = vadd.f32 %v67, %v170
    %v173 = vxor.u32 %v172, 2147483648
    %v174 = vmul.f32 %v173, 1.442695
    %v175 = vpow.pop %v174
    %v176 = vadd.f32 %v175, 1.0
    %v177 = vrcp.pop %v176
    %v178 = vmul.f32 %v176, %v177
    %v179 = vsub.f32 1.0, %v178
    %v180 = vmul.f32 %v177, %v179
    %v181 = vadd.f32 %v177, %v180
    %vm182 = vweird.f32 %v176
    %vm183 = vweird.f32 %v177
    %vm184 = vmor %vm182, %vm183
    %v185 = vsel %vm184, %v177, %v181
    %v186 = vand.u32 2147483647, %v176
    %vm187 = vcmp.eq.f32.partialorder %v186, 8.507059e+37
    %v188 = vand.u32 %v176, 2147483648
    %v189 = vor.u32 1.1754944e-38, %v188
    %v190 = vsel %vm187, %v189, %v185
    %v191 = vmul.f32 1.0, %v190
    %v192 = vtanh.pop %v172
    %v194 = vrot.slane %v137, 6
    %v196 = vmul.f32 %v191, %v194
    %198 = vrot.lane.b32.xlu0 %v192, 64
    %v199 = vpop.permute.xlu0 %198
    %v201 = vmul.f32 %v191, %v199
    %203 = vrot.lane.b32.xlu0 %v201, 32
    %v204 = vpop.permute.xlu0 %203
    %v206 = vadd.f32 %v196, %v204
    %v207 = vtanh.pop %v206
    %209 = vrot.lane.b32.xlu0 %v207, 64
    %v210 = vpop.permute.xlu0 %209
    %v212 = vmul.f32 %v191, %v210
    %v214 = vrot.slane %v212, 2
    %215 = vrot.lane.b32.xlu0 %v214, 32
    %v216 = vpop.permute.xlu0 %215
    %v217 = vsel %vm78, %v216, 0
    %219 = vmatpush.msra.mxu0 0.0
    %220 = vmatpush.msra.mxu0 0.0
    %221 = vmatpush.msra.mxu0 0.0
    %222 = vmatpush.msra.mxu0 0.0
    %223 = vmatpush.msra.mxu0 0.0
    %224 = vmatpush.msra.mxu0 0.0
    %225 = vmatpush.msra.mxu0 0.0
    %226 = vmatpush.msra.mxu0 0.0
    %227 = vmatpush.msra.mxu0 0.0
    %228 = vmatpush.msra.mxu0 0.0
    %229 = vmatpush.msra.mxu0 0.0
    %230 = vmatpush.msra.mxu0 0.0
    %231 = vmatpush.msra.mxu0 %v75
    %232 = vmatpush.msra.mxu0 %v74
    %233 = vmatpush.msra.mxu0 %v73
    %234 = vmatpush.msra.mxu0 %v72
    %235 = vmatmul.f32.gmra.mxu0 %v217
    %v236 = vpop.f32.mrf.mxu0
    %v237 = vadd.f32 0.0, %v236
    %238 = vdwg.mxu0
    %v240 = vrot.slane %v237, 4
    %v242 = vadd.f32 %v67, %v240
    %v243 = vxor.u32 %v242, 2147483648
    %v244 = vmul.f32 %v243, 1.442695
    %v245 = vpow.pop %v244
    %v246 = vadd.f32 %v245, 1.0
    %v247 = vrcp.pop %v246
    %v248 = vmul.f32 %v246, %v247
    %v249 = vsub.f32 1.0, %v248
    %v250 = vmul.f32 %v247, %v249
    %v251 = vadd.f32 %v247, %v250
    %vm252 = vweird.f32 %v246
    %vm253 = vweird.f32 %v247
    %vm254 = vmor %vm252, %vm253
    %v255 = vsel %vm254, %v247, %v251
    %v256 = vand.u32 2147483647, %v246
    %vm257 = vcmp.eq.f32.partialorder %v256, 8.507059e+37
    %v258 = vand.u32 %v246, 2147483648
    %v259 = vor.u32 1.1754944e-38, %v258
    %v260 = vsel %vm257, %v259, %v255
    %v261 = vmul.f32 1.0, %v260
    %v262 = vtanh.pop %v242
    %v264 = vrot.slane %v206, 6
    %v266 = vmul.f32 %v261, %v264
    %268 = vrot.lane.b32.xlu0 %v262, 64
    %v269 = vpop.permute.xlu0 %268
    %v271 = vmul.f32 %v261, %v269
    %273 = vrot.lane.b32.xlu0 %v271, 32
    %v274 = vpop.permute.xlu0 %273
    %v276 = vadd.f32 %v266, %v274
    %v277 = vtanh.pop %v276
    %279 = vrot.lane.b32.xlu0 %v277, 64
    %v280 = vpop.permute.xlu0 %279
    %v282 = vmul.f32 %v261, %v280
    %v284 = vrot.slane %v282, 4
    %285 = vrot.lane.b32.xlu0 %v284, 32
    %v286 = vpop.permute.xlu0 %285
    %v287 = vsel %vm78, %v286, 0
    %289 = vmatpush.msra.mxu0 0.0
    %290 = vmatpush.msra.mxu0 0.0
    %291 = vmatpush.msra.mxu0 0.0
    %292 = vmatpush.msra.mxu0 0.0
    %293 = vmatpush.msra.mxu0 0.0
    %294 = vmatpush.msra.mxu0 0.0
    %295 = vmatpush.msra.mxu0 0.0
    %296 = vmatpush.msra.mxu0 0.0
    %297 = vmatpush.msra.mxu0 0.0
    %298 = vmatpush.msra.mxu0 0.0
    %299 = vmatpush.msra.mxu0 0.0
    %300 = vmatpush.msra.mxu0 0.0
    %301 = vmatpush.msra.mxu0 %v75
    %302 = vmatpush.msra.mxu0 %v74
    %303 = vmatpush.msra.mxu0 %v73
    %304 = vmatpush.msra.mxu0 %v72
    %305 = vmatmul.f32.gmra.mxu0 %v287
    %v306 = vpop.f32.mrf.mxu0
    %v307 = vadd.f32 0.0, %v306
    %308 = vdwg.mxu0
    %v310 = vrot.slane %v307, 2
    %v312 = vadd.f32 %v67, %v310
    %v313 = vxor.u32 %v312, 2147483648
    %v314 = vmul.f32 %v313, 1.442695
    %v315 = vpow.pop %v314
    %v316 = vadd.f32 %v315, 1.0
    %v317 = vrcp.pop %v316
    %v318 = vmul.f32 %v316, %v317
    %v319 = vsub.f32 1.0, %v318
    %v320 = vmul.f32 %v317, %v319
    %v321 = vadd.f32 %v317, %v320
    %vm322 = vweird.f32 %v316
    %vm323 = vweird.f32 %v317
    %vm324 = vmor %vm322, %vm323
    %v325 = vsel %vm324, %v317, %v321
    %v326 = vand.u32 2147483647, %v316
    %vm327 = vcmp.eq.f32.partialorder %v326, 8.507059e+37
    %v328 = vand.u32 %v316, 2147483648
    %v329 = vor.u32 1.1754944e-38, %v328
    %v330 = vsel %vm327, %v329, %v325
    %v331 = vmul.f32 1.0, %v330
    %v332 = vtanh.pop %v312
    %v334 = vrot.slane %v276, 6
    %v336 = vmul.f32 %v331, %v334
    %338 = vrot.lane.b32.xlu0 %v332, 64
    %v339 = vpop.permute.xlu0 %338
    %v341 = vmul.f32 %v331, %v339
    %343 = vrot.lane.b32.xlu0 %v341, 32
    %v344 = vpop.permute.xlu0 %343
    %v346 = vadd.f32 %v336, %v344
    %v347 = vtanh.pop %v346
    %349 = vrot.lane.b32.xlu0 %v347, 64
    %v350 = vpop.permute.xlu0 %349
    %v352 = vmul.f32 %v331, %v350
    %v354 = vrot.slane %v352, 6
    %355 = vrot.lane.b32.xlu0 %v354, 32
    %v356 = vpop.permute.xlu0 %355
    %v357 = vsel %vm78, %v356, 0
    %359 = vmatpush.msra.mxu0 0.0
    %360 = vmatpush.msra.mxu0 0.0
    %361 = vmatpush.msra.mxu0 0.0
    %362 = vmatpush.msra.mxu0 0.0
    %363 = vmatpush.msra.mxu0 0.0
    %364 = vmatpush.msra.mxu0 0.0
    %365 = vmatpush.msra.mxu0 0.0
    %366 = vmatpush.msra.mxu0 0.0
    %367 = vmatpush.msra.mxu0 0.0
    %368 = vmatpush.msra.mxu0 0.0
    %369 = vmatpush.msra.mxu0 0.0
    %370 = vmatpush.msra.mxu0 0.0
    %371 = vmatpush.msra.mxu0 %v75
    %372 = vmatpush.msra.mxu0 %v74
    %373 = vmatpush.msra.mxu0 %v73
    %374 = vmatpush.msra.mxu0 %v72
    %375 = vmatmul.f32.gmra.mxu0 %v357
    %v376 = vpop.f32.mrf.mxu0
    %v377 = vadd.f32 0.0, %v376
    %378 = vdwg.mxu0
    %v379 = vadd.f32 %v70, %v377
    %v380 = vxor.u32 %v379, 2147483648
    %v381 = vmul.f32 %v380, 1.442695
    %v382 = vpow.pop %v381
    %v383 = vadd.f32 %v382, 1.0
    %v384 = vrcp.pop %v383
    %v385 = vmul.f32 %v383, %v384
    %v386 = vsub.f32 1.0, %v385
    %v387 = vmul.f32 %v384, %v386
    %v388 = vadd.f32 %v384, %v387
    %vm389 = vweird.f32 %v383
    %vm390 = vweird.f32 %v384
    %vm391 = vmor %vm389, %vm390
    %v392 = vsel %vm391, %v384, %v388
    %v393 = vand.u32 2147483647, %v383
    %vm394 = vcmp.eq.f32.partialorder %v393, 8.507059e+37
    %v395 = vand.u32 %v383, 2147483648
    %v396 = vor.u32 1.1754944e-38, %v395
    %v397 = vsel %vm394, %v396, %v392
    %v398 = vmul.f32 1.0, %v397
    %v399 = vtanh.pop %v379
    %v401 = vrot.slane %v346, 6
    %v403 = vmul.f32 %v398, %v401
    %405 = vrot.lane.b32.xlu0 %v399, 64
    %v406 = vpop.permute.xlu0 %405
    %v408 = vmul.f32 %v398, %v406
    %410 = vrot.lane.b32.xlu0 %v408, 32
    %v411 = vpop.permute.xlu0 %410
    %v413 = vadd.f32 %v403, %v411
    %v414 = vtanh.pop %v413
    %416 = vrot.lane.b32.xlu0 %v414, 64
    %v417 = vpop.permute.xlu0 %416
    %v419 = vmul.f32 %v398, %v417
    %421 = vrot.lane.b32.xlu0 %v419, 32
    %v422 = vpop.permute.xlu0 %421
    %v423 = vsel %vm78, %v422, 0
    %425 = vmatpush.msra.mxu0 0.0
    %426 = vmatpush.msra.mxu0 0.0
    %427 = vmatpush.msra.mxu0 0.0
    %428 = vmatpush.msra.mxu0 0.0
    %429 = vmatpush.msra.mxu0 0.0
    %430 = vmatpush.msra.mxu0 0.0
    %431 = vmatpush.msra.mxu0 0.0
    %432 = vmatpush.msra.mxu0 0.0
    %433 = vmatpush.msra.mxu0 0.0
    %434 = vmatpush.msra.mxu0 0.0
    %435 = vmatpush.msra.mxu0 0.0
    %436 = vmatpush.msra.mxu0 0.0
    %437 = vmatpush.msra.mxu0 %v75
    %438 = vmatpush.msra.mxu0 %v74
    %439 = vmatpush.msra.mxu0 %v73
    %440 = vmatpush.msra.mxu0 %v72
    %441 = vmatmul.f32.gmra.mxu0 %v423
    %v442 = vpop.f32.mrf.mxu0
    %v443 = vadd.f32 0.0, %v442
    %444 = vdwg.mxu0
    %v446 = vrot.slane %v443, 6
    %v448 = vadd.f32 %v70, %v446
    %v449 = vxor.u32 %v448, 2147483648
    %v450 = vmul.f32 %v449, 1.442695
    %v451 = vpow.pop %v450
    %v452 = vadd.f32 %v451, 1.0
    %v453 = vrcp.pop %v452
    %v454 = vmul.f32 %v452, %v453
    %v455 = vsub.f32 1.0, %v454
    %v456 = vmul.f32 %v453, %v455
    %v457 = vadd.f32 %v453, %v456
    %vm458 = vweird.f32 %v452
    %vm459 = vweird.f32 %v453
    %vm460 = vmor %vm458, %vm459
    %v461 = vsel %vm460, %v453, %v457
    %v462 = vand.u32 2147483647, %v452
    %vm463 = vcmp.eq.f32.partialorder %v462, 8.507059e+37
    %v464 = vand.u32 %v452, 2147483648
    %v465 = vor.u32 1.1754944e-38, %v464
    %v466 = vsel %vm463, %v465, %v461
    %v467 = vmul.f32 1.0, %v466
    %v468 = vtanh.pop %v448
    %v470 = vrot.slane %v413, 6
    %v472 = vmul.f32 %v467, %v470
    %474 = vrot.lane.b32.xlu0 %v468, 64
    %v475 = vpop.permute.xlu0 %474
    %v477 = vmul.f32 %v467, %v475
    %479 = vrot.lane.b32.xlu0 %v477, 32
    %v480 = vpop.permute.xlu0 %479
    %v482 = vadd.f32 %v472, %v480
    %v483 = vtanh.pop %v482
    %485 = vrot.lane.b32.xlu0 %v483, 64
    %v486 = vpop.permute.xlu0 %485
    %v488 = vmul.f32 %v467, %v486
    %v490 = vrot.slane %v488, 2
    %491 = vrot.lane.b32.xlu0 %v490, 32
    %v492 = vpop.permute.xlu0 %491
    %v493 = vsel %vm78, %v492, 0
    %495 = vmatpush.msra.mxu0 0.0
    %496 = vmatpush.msra.mxu0 0.0
    %497 = vmatpush.msra.mxu0 0.0
    %498 = vmatpush.msra.mxu0 0.0
    %499 = vmatpush.msra.mxu0 0.0
    %500 = vmatpush.msra.mxu0 0.0
    %501 = vmatpush.msra.mxu0 0.0
    %502 = vmatpush.msra.mxu0 0.0
    %503 = vmatpush.msra.mxu0 0.0
    %504 = vmatpush.msra.mxu0 0.0
    %505 = vmatpush.msra.mxu0 0.0
    %506 = vmatpush.msra.mxu0 0.0
    %507 = vmatpush.msra.mxu0 %v75
    %508 = vmatpush.msra.mxu0 %v74
    %509 = vmatpush.msra.mxu0 %v73
    %510 = vmatpush.msra.mxu0 %v72
    %511 = vmatmul.f32.gmra.mxu0 %v493
    %v512 = vpop.f32.mrf.mxu0
    %v513 = vadd.f32 0.0, %v512
    %514 = vdwg.mxu0
    %v516 = vrot.slane %v513, 4
    %v518 = vadd.f32 %v70, %v516
    %v519 = vxor.u32 %v518, 2147483648
    %v520 = vmul.f32 %v519, 1.442695
    %v521 = vpow.pop %v520
    %v522 = vadd.f32 %v521, 1.0
    %v523 = vrcp.pop %v522
    %v524 = vmul.f32 %v522, %v523
    %v525 = vsub.f32 1.0, %v524
    %v526 = vmul.f32 %v523, %v525
    %v527 = vadd.f32 %v523, %v526
    %vm528 = vweird.f32 %v522
    %vm529 = vweird.f32 %v523
    %vm530 = vmor %vm528, %vm529
    %v531 = vsel %vm530, %v523, %v527
    %v532 = vand.u32 2147483647, %v522
    %vm533 = vcmp.eq.f32.partialorder %v532, 8.507059e+37
    %v534 = vand.u32 %v522, 2147483648
    %v535 = vor.u32 1.1754944e-38, %v534
    %v536 = vsel %vm533, %v535, %v531
    %v537 = vmul.f32 1.0, %v536
    %v538 = vtanh.pop %v518
    %v540 = vrot.slane %v482, 6
    %v542 = vmul.f32 %v537, %v540
    %544 = vrot.lane.b32.xlu0 %v538, 64
    %v545 = vpop.permute.xlu0 %544
    %v547 = vmul.f32 %v537, %v545
    %549 = vrot.lane.b32.xlu0 %v547, 32
    %v550 = vpop.permute.xlu0 %549
    %v552 = vadd.f32 %v542, %v550
    %v553 = vtanh.pop %v552
    %555 = vrot.lane.b32.xlu0 %v553, 64
    %v556 = vpop.permute.xlu0 %555
    %v558 = vmul.f32 %v537, %v556
    %v560 = vrot.slane %v558, 4
    %561 = vrot.lane.b32.xlu0 %v560, 32
    %v562 = vpop.permute.xlu0 %561
    %v563 = vsel %vm78, %v562, 0
    %565 = vmatpush.msra.mxu0 0.0
    %566 = vmatpush.msra.mxu0 0.0
    %567 = vmatpush.msra.mxu0 0.0
    %568 = vmatpush.msra.mxu0 0.0
    %569 = vmatpush.msra.mxu0 0.0
    %570 = vmatpush.msra.mxu0 0.0
    %571 = vmatpush.msra.mxu0 0.0
    %572 = vmatpush.msra.mxu0 0.0
    %573 = vmatpush.msra.mxu0 0.0
    %574 = vmatpush.msra.mxu0 0.0
    %575 = vmatpush.msra.mxu0 0.0
    %576 = vmatpush.msra.mxu0 0.0
    %577 = vmatpush.msra.mxu0 %v75
    %578 = vmatpush.msra.mxu0 %v74
    %579 = vmatpush.msra.mxu0 %v73
    %580 = vmatpush.msra.mxu0 %v72
    %581 = vmatmul.f32.gmra.mxu0 %v563
    %v582 = vpop.f32.mrf.mxu0
    %v583 = vadd.f32 0.0, %v582
    %584 = vdwg.mxu0
    %v586 = vrot.slane %v583, 2
    %v588 = vadd.f32 %v70, %v586
    %v589 = vxor.u32 %v588, 2147483648
    %v590 = vmul.f32 %v589, 1.442695
    %v591 = vpow.pop %v590
    %v592 = vadd.f32 %v591, 1.0
    %v593 = vrcp.pop %v592
    %v594 = vmul.f32 %v592, %v593
    %v595 = vsub.f32 1.0, %v594
    %v596 = vmul.f32 %v593, %v595
    %v597 = vadd.f32 %v593, %v596
    %vm598 = vweird.f32 %v592
    %vm599 = vweird.f32 %v593
    %vm600 = vmor %vm598, %vm599
    %v601 = vsel %vm600, %v593, %v597
    %v602 = vand.u32 2147483647, %v592
    %vm603 = vcmp.eq.f32.partialorder %v602, 8.507059e+37
    %v604 = vand.u32 %v592, 2147483648
    %v605 = vor.u32 1.1754944e-38, %v604
    %v606 = vsel %vm603, %v605, %v601
    %v607 = vmul.f32 1.0, %v606
    %v608 = vtanh.pop %v588
    %v610 = vrot.slane %v552, 6
    %v612 = vmul.f32 %v607, %v610
    %614 = vrot.lane.b32.xlu0 %v608, 64
    %v615 = vpop.permute.xlu0 %614
    %v617 = vmul.f32 %v607, %v615
    %619 = vrot.lane.b32.xlu0 %v617, 32
    %v620 = vpop.permute.xlu0 %619
    %v622 = vadd.f32 %v612, %v620
    %v623 = vtanh.pop %v622
    %625 = vrot.lane.b32.xlu0 %v623, 64
    %v626 = vpop.permute.xlu0 %625
    %v628 = vmul.f32 %v607, %v626
    %v629 = vld [vmem:[%s6] sm:$0xff]
    %v630 = vld [vmem:[%s6 + $0x8] sm:$0xff]
    %v631 = vld [vmem:[%s6 + $0x10] sm:$0xff]
    %v632 = vld [vmem:[%s6 + $0x18] sm:$0xff]
    %v633 = vld [vmem:[%s7] sm:$0x1]
    %v635 = vperm.slane %v633, 0
    %v638 = vrot.slane %v628, 6
    %639 = vrot.lane.b32.xlu0 %v638, 32
    %v640 = vpop.permute.xlu0 %639
    %v641 = vsel %vm78, %v640, 0
    %643 = vmatpush.msra.mxu0 0.0
    %644 = vmatpush.msra.mxu0 0.0
    %645 = vmatpush.msra.mxu0 0.0
    %646 = vmatpush.msra.mxu0 0.0
    %647 = vmatpush.msra.mxu0 0.0
    %648 = vmatpush.msra.mxu0 0.0
    %649 = vmatpush.msra.mxu0 0.0
    %650 = vmatpush.msra.mxu0 0.0
    %651 = vmatpush.msra.mxu0 0.0
    %652 = vmatpush.msra.mxu0 0.0
    %653 = vmatpush.msra.mxu0 0.0
    %654 = vmatpush.msra.mxu0 0.0
    %655 = vmatpush.msra.mxu0 %v632
    %656 = vmatpush.msra.mxu0 %v631
    %657 = vmatpush.msra.mxu0 %v630
    %658 = vmatpush.msra.mxu0 %v629
    %659 = vmatmul.f32.gmra.mxu0 %v641
    %v660 = vpop.f32.mrf.mxu0
    %v661 = vadd.f32 %v635, %v660
    %662 = vdwg.mxu0
    %vm663 = vcmask 33792
    %v664 = vsel %vm663, %v661, -inf
    %665 = vmax.xlane.f32.xlu0 %v664
    %v666 = vpop.xlane.xlu0 %665
    %v667 = vsub.f32 %v661, %v666
    %v668 = vmul.f32 %v667, 1.442695
    %v669 = vpow.pop %v668
    %v670 = vsel %vm663, %v669, 0.0
    %671 = vadd.xlane.f32.xlu0 %v670
    %v672 = vpop.xlane.xlu0 %671
    %v673 = vlog2.pop %v672
    %v674 = vmul.f32 %v673, 0.6931472
    %v675 = vsub.f32 %v667, %v674
    %676 = vst.msk [vmem:[#allocation2] sm:$0x3] %vm663, %v675
    %677 = vrot.lane.b32.xlu0 %v628, 32
    %v678 = vpop.permute.xlu0 %677
    %vm680 = vcmask 261126
    %681 = vst.msk [vmem:[#allocation4 - $0x6] sm:$0xc0] %vm680, %v678
    %683 = vrot.lane.b32.xlu0 %v622, 96
    %v684 = vpop.permute.xlu0 %683
    %686 = vst.msk [vmem:[#allocation6 - $0x6] sm:$0xc0] %vm680, %v684
    // Predicated region
    $region34: #{char_level_lstm_forward.1} parent=1 // pred_check
      _
    $region35: #{char_level_lstm_forward.1} parent=1 // pred_check_branch
      %688 = sbr.rel (0) target = $region37
    $region36: #{char_level_lstm_forward.1} parent=1 // pred_region
      %690 = vsyncadd [#allocation3], 0
      %s692 = sshll.u32 [#allocation2], 4
      %s693 = int_to_ptr.vmem [resolvable:$true] %s692
      %s694 = sshll.u32 %s8, 4
      %s695 = int_to_ptr.hbm [resolvable:$true] %s694
      %697 = dma.vmem_to_hbm [thread:$0]  %s693, 32, %s695, [#allocation3]
    $region37: #{char_level_lstm_forward.1} parent=1 // pred_fallthru
      _
    // Predicated region
    $region38: #{char_level_lstm_forward.1} parent=1 // pred_check
      _
    $region39: #{char_level_lstm_forward.1} parent=1 // pred_check_branch
      %699 = sbr.rel (0) target = $region41
    $region40: #{char_level_lstm_forward.1} parent=1 // pred_region
      %701 = vsyncadd [#allocation5], 0
      %s703 = sshll.u32 [#allocation4], 4
      %s704 = int_to_ptr.vmem [resolvable:$true] %s703
      %s705 = sshll.u32 %s9, 4
      %s706 = int_to_ptr.hbm [resolvable:$true] %s705
      %708 = dma.vmem_to_hbm [thread:$0]  %s704, 32, %s706, [#allocation5]
    $region41: #{char_level_lstm_forward.1} parent=1 // pred_fallthru
      _
    // Predicated region
    $region42: #{char_level_lstm_forward.1} parent=1 // pred_check
      _
    $region43: #{char_level_lstm_forward.1} parent=1 // pred_check_branch
      %710 = sbr.rel (0) target = $region45
    $region44: #{char_level_lstm_forward.1} parent=1 // pred_region
      %712 = vsyncadd [#allocation5], 0
      %s714 = sshll.u32 [#allocation6], 4
      %s715 = int_to_ptr.vmem [resolvable:$true] %s714
      %s716 = sshll.u32 %s10, 4
      %s717 = int_to_ptr.hbm [resolvable:$true] %s716
      %719 = dma.vmem_to_hbm [thread:$0]  %s715, 32, %s717, [#allocation5]
    $region45: #{char_level_lstm_forward.1} parent=1 // pred_fallthru
      _
    // Predicated region
    $region46: #{char_level_lstm_forward.1} parent=1 // pred_check
      _
    $region47: #{char_level_lstm_forward.1} parent=1 // pred_check_branch
      %721 = sbr.rel (0) target = $region49
    $region48: #{char_level_lstm_forward.1} parent=1 // pred_region
      %723 = dma.done [#allocation3], 32
    $region49: #{char_level_lstm_forward.1} parent=1 // pred_fallthru
      _
    // Predicated region
    $region50: #{char_level_lstm_forward.1} parent=1 // pred_check
      _
    $region51: #{char_level_lstm_forward.1} parent=1 // pred_check_branch
      %725 = sbr.rel (0) target = $region53
    $region52: #{char_level_lstm_forward.1} parent=1 // pred_region
      %727 = dma.done [#allocation5], 32
    $region53: #{char_level_lstm_forward.1} parent=1 // pred_fallthru
      _
    // Predicated region
    $region54: #{char_level_lstm_forward.1} parent=1 // pred_check
      _
    $region55: #{char_level_lstm_forward.1} parent=1 // pred_check_branch
      %729 = sbr.rel (0) target = $region57
    $region56: #{char_level_lstm_forward.1} parent=1 // pred_region
      %731 = dma.done [#allocation5], 32
    $region57: #{char_level_lstm_forward.1} parent=1 // pred_fallthru
      _
    %732 = vsyncpa [#allocation3], 1
    %733 = vsyncpa [#allocation5], 1

</llo_original>
